<compile_context>
chip_gen: v6e
topology: v6e:2x2x1
jax: 0.10.0
libtpu: 0.0.40
codegen_flags: <defaults>
</compile_context>

<pallas_src>
import functools

import jax
import jax.numpy as jnp
from jax.experimental import pallas as pl
from jax.experimental.pallas import tpu as pltpu


def _round_up(x, m):
    return ((x + m - 1) // m) * m


def _cdiv(a, b):
    return (a + b - 1) // b


# ---------------------------------------------------------------------------
# Kernel: one grid step emits a [tile_n, 3*P] slab of sample_points in the
# final [N, P, 3] row-major layout:
#     out[n, 3p + c] = z[p] * d[n, c] + o[n, c]
# zc_ref holds two tiny constant rows:
#     zc[0, 3p + c] = z[p]          (z repeated 3x along lanes)
#     zc[1, 3p + c] = float(c)      (coordinate id 0/1/2 per lane)
# Each coordinate term t_c = z * d[:, c] + o[:, c] is a broadcast mul/add
# ([1, 3P] x [tile_n, 1]); two selects interleave them into the final layout.
# Everything is exact f32 VPU work; the kernel is HBM-store bound.
# ---------------------------------------------------------------------------
def _sampler_kernel(zc_ref, d_ref, o_ref, out_ref):
    zc = zc_ref[...]                 # [2, 3P] f32
    zi = zc[0:1, :]                  # [1, 3P]  z repeated per coordinate
    cs = zc[1:2, :]                  # [1, 3P]  coordinate id (0., 1., 2.)
    d = d_ref[...]                   # [tile_n, 3]
    o = o_ref[...]                   # [tile_n, 3]

    t0 = zi * d[:, 0:1] + o[:, 0:1]  # [tile_n, 3P] (value for lanes with c==0)
    t1 = zi * d[:, 1:2] + o[:, 1:2]
    t2 = zi * d[:, 2:3] + o[:, 2:3]

    out_ref[...] = jnp.where(cs == 0.0, t0, jnp.where(cs == 1.0, t1, t2))


_VMEM_OUT_BLOCK_BUDGET = 4 << 20      # one (lane-padded) output block, bytes


def _pick_tile_n(n_rays, n_pts_per_ray, requested):
    """Rows per grid step (multiple of 8)."""
    padded_row_bytes = _round_up(3 * n_pts_per_ray, 128) * 4
    target = 2048 if requested is None else max(8, int(requested))
    # Keep one output block within the VMEM budget (double-buffered + temps).
    cap_vmem = max(8, ((_VMEM_OUT_BLOCK_BUDGET // padded_row_bytes) // 8) * 8)
    # v7x has 2 TensorCores: for large N keep the grid >= ~8 steps so
    # dimension_semantics=("parallel",) can shard it (floor of 1024 rows/step).
    cap_grid = max(1024, _round_up(_cdiv(n_rays, 8), 8))
    tile = min(target, cap_vmem, cap_grid, _round_up(n_rays, 8))
    return max(8, _round_up(tile, 8))


def stratified_raysampler(directions, origins, *, n_pts_per_ray, min_depth,
                          max_depth, tile_n=None, materialize_lengths=False):
    """Pallas TPU StratifiedRaysampler forward.

    directions, origins: [..., 3] arrays with the same number of rays N.
    Returns (sample_points [N, P, 3], sample_lengths), where sample_lengths is
    a broadcastable [1, P, 1] (== z_vals) unless materialize_lengths=True, in
    which case it is densified to [N, P, 1] (matching the PyTorch shape).
    """
    P = int(n_pts_per_ray)
    d = jnp.asarray(directions, jnp.float32).reshape(-1, 3)
    o = jnp.asarray(origins, jnp.float32).reshape(-1, 3)
    N = d.shape[0]

    # z once (jnp.linspace handles P == 1 safely), plus the two tiny constant
    # rows the kernel uses to broadcast/interleave (constant-folded under jit).
    z = jnp.linspace(float(min_depth), float(max_depth), P, dtype=jnp.float32)
    zc = jnp.stack(
        [jnp.repeat(z, 3),                                   # z[p] at lane 3p+c
         jnp.tile(jnp.arange(3, dtype=jnp.float32), P)],     # c    at lane 3p+c
        axis=0)                                              # [2, 3P]

    tn = _pick_tile_n(N, P, tile_n)
    grid = (_cdiv(N, tn),)

    out_block_bytes = tn * _round_up(3 * P, 128) * 4
    vmem_limit = int(min(48 << 20, max(32 << 20, 12 * out_block_bytes)))

    pts2d = pl.pallas_call(
        _sampler_kernel,
        out_shape=jax.ShapeDtypeStruct((N, 3 * P), jnp.float32),
        grid_spec=pltpu.PrefetchScalarGridSpec(
            num_scalar_prefetch=0,
            grid=grid,
            in_specs=[
                pl.BlockSpec((2, 3 * P), lambda i: (0, 0)),   # zc (constant)
                pl.BlockSpec((tn, 3), lambda i: (i, 0)),      # directions
                pl.BlockSpec((tn, 3), lambda i: (i, 0)),      # origins
            ],
            out_specs=pl.BlockSpec((tn, 3 * P), lambda i: (i, 0)),
        ),
        compiler_params=pltpu.CompilerParams(
            dimension_semantics=("parallel",),
            vmem_limit_bytes=vmem_limit),
    )(zc, d, o)

    # Row-major (N, 3P) and (N, P, 3) share the same byte layout: this reshape
    # is metadata-only (free under jit) -- no transpose, no extra HBM pass.
    sample_points = pts2d.reshape(N, P, 3)

    # sample_lengths == z broadcast over rays; keep it lazy by default so we
    # do not write N*P*4 bytes of pure redundancy.
    sample_lengths = z.reshape(1, P, 1)
    if materialize_lengths:
        sample_lengths = jnp.broadcast_to(sample_lengths, (N, P, 1))
    return sample_points, sample_lengths


if __name__ == "__main__":
    n_pts_per_ray = 64
    min_depth = 0.1
    max_depth = 5.0

    key = jax.random.PRNGKey(0)
    k_dir, k_org = jax.random.split(key)

    def reference(dirs, orgs):
        zv = jnp.linspace(min_depth, max_depth, n_pts_per_ray,
                          dtype=jnp.float32)[None, :, None]           # [1,P,1]
        pts = zv * dirs[:, None, :] + orgs[:, None, :]                # [N,P,3]
        lens = zv * jnp.ones_like(pts[..., :1])                       # [N,P,1]
        return pts, lens

    # Case 1: small ray bundle (N = 16), default tiling, lazy lengths.
    N1 = 16
    dirs1 = jax.random.normal(k_dir, (N1, 3), dtype=jnp.float32)
    orgs1 = jax.random.normal(k_org, (N1, 3), dtype=jnp.float32)
    sampler1 = jax.jit(functools.partial(
        stratified_raysampler, n_pts_per_ray=n_pts_per_ray,
        min_depth=min_depth, max_depth=max_depth))
    pts1, lens1 = sampler1(dirs1, orgs1)
    jax.block_until_ready(pts1)
    jax.block_until_ready(lens1)
    ref_pts1, ref_lens1 = reference(dirs1, orgs1)
    assert pts1.shape == (N1, n_pts_per_ray, 3)
    assert lens1.shape == (1, n_pts_per_ray, 1)          # lazy / broadcastable
    assert jnp.allclose(pts1, ref_pts1, atol=1e-5, rtol=1e-5)
    assert jnp.allclose(jnp.broadcast_to(lens1, ref_lens1.shape), ref_lens1,
                        atol=1e-6, rtol=1e-6)

    # Case 2: multi-step grid with a partial final block (N = 200, tile_n = 64)
    # and materialized lengths (exact PyTorch shapes).
    N2 = 200
    dirs2 = jax.random.normal(k_dir, (N2, 3), dtype=jnp.float32)
    orgs2 = jax.random.normal(k_org, (N2, 3), dtype=jnp.float32)
    sampler2 = jax.jit(functools.partial(
        stratified_raysampler, n_pts_per_ray=n_pts_per_ray,
        min_depth=min_depth, max_depth=max_depth, tile_n=64,
        materialize_lengths=True))
    pts2, lens2 = sampler2(dirs2, orgs2)
    jax.block_until_ready(pts2)
    jax.block_until_ready(lens2)
    ref_pts2, ref_lens2 = reference(dirs2, orgs2)
    assert pts2.shape == (N2, n_pts_per_ray, 3)
    assert lens2.shape == (N2, n_pts_per_ray, 1)
    assert jnp.allclose(pts2, ref_pts2, atol=1e-5, rtol=1e-5)
    assert jnp.allclose(lens2, ref_lens2, atol=1e-6, rtol=1e-6)

    print("KERNEL_OK")
</pallas_src>

<mosaic_0001>
module attributes {stable_mosaic.version = 11 : i64} {
  func.func @_sampler_kernel(%arg0: i32, %arg1: memref<2x192xf32, #tpu.memory_space<vmem>>, %arg2: memref<16x3xf32, #tpu.memory_space<vmem>>, %arg3: memref<16x3xf32, #tpu.memory_space<vmem>>, %arg4: memref<16x192xf32, #tpu.memory_space<vmem>>) attributes {dimension_semantics = [#tpu.dimension_semantics<parallel>], iteration_bounds = array<i64: 1>, scalar_prefetch = 0 : i64, scratch_operands = 0 : i64, tpu.core_type = #tpu.core_type<tc>, window_params = [{pipeline_mode = #tpu.pipeline_mode<synchronous>, transform_indices = @transform_0, window_bounds = array<i64: 2, 192>}, {transform_indices = @transform_1, window_bounds = array<i64: 16, 3>}, {transform_indices = @transform_2, window_bounds = array<i64: 16, 3>}, {transform_indices = @transform_3, window_bounds = array<i64: 16, 192>}]} {
    %c0 = arith.constant 0 : index
    %c0_0 = arith.constant 0 : index
    %0 = vector.load %arg1[%c0, %c0_0] : memref<2x192xf32, #tpu.memory_space<vmem>>, vector<2x192xf32>
    %1 = vector.extract_strided_slice %0 {offsets = [0, 0], sizes = [1, 192], strides = [1, 1]} : vector<2x192xf32> to vector<1x192xf32>
    %2 = vector.extract_strided_slice %0 {offsets = [1, 0], sizes = [1, 192], strides = [1, 1]} : vector<2x192xf32> to vector<1x192xf32>
    %c0_1 = arith.constant 0 : index
    %c0_2 = arith.constant 0 : index
    %3 = vector.load %arg2[%c0_1, %c0_2] : memref<16x3xf32, #tpu.memory_space<vmem>>, vector<16x3xf32>
    %c0_3 = arith.constant 0 : index
    %c0_4 = arith.constant 0 : index
    %4 = vector.load %arg3[%c0_3, %c0_4] : memref<16x3xf32, #tpu.memory_space<vmem>>, vector<16x3xf32>
    %5 = vector.extract_strided_slice %3 {offsets = [0, 0], sizes = [16, 1], strides = [1, 1]} : vector<16x3xf32> to vector<16x1xf32>
    %6 = vector.broadcast %1 : vector<1x192xf32> to vector<16x192xf32>
    %7 = vector.broadcast %5 : vector<16x1xf32> to vector<16x192xf32>
    %8 = arith.mulf %6, %7 : vector<16x192xf32>
    %9 = vector.extract_strided_slice %4 {offsets = [0, 0], sizes = [16, 1], strides = [1, 1]} : vector<16x3xf32> to vector<16x1xf32>
    %10 = vector.broadcast %9 : vector<16x1xf32> to vector<16x192xf32>
    %11 = arith.addf %8, %10 : vector<16x192xf32>
    %12 = vector.extract_strided_slice %3 {offsets = [0, 1], sizes = [16, 1], strides = [1, 1]} : vector<16x3xf32> to vector<16x1xf32>
    %13 = vector.broadcast %1 : vector<1x192xf32> to vector<16x192xf32>
    %14 = vector.broadcast %12 : vector<16x1xf32> to vector<16x192xf32>
    %15 = arith.mulf %13, %14 : vector<16x192xf32>
    %16 = vector.extract_strided_slice %4 {offsets = [0, 1], sizes = [16, 1], strides = [1, 1]} : vector<16x3xf32> to vector<16x1xf32>
    %17 = vector.broadcast %16 : vector<16x1xf32> to vector<16x192xf32>
    %18 = arith.addf %15, %17 : vector<16x192xf32>
    %19 = vector.extract_strided_slice %3 {offsets = [0, 2], sizes = [16, 1], strides = [1, 1]} : vector<16x3xf32> to vector<16x1xf32>
    %20 = vector.broadcast %1 : vector<1x192xf32> to vector<16x192xf32>
    %21 = vector.broadcast %19 : vector<16x1xf32> to vector<16x192xf32>
    %22 = arith.mulf %20, %21 : vector<16x192xf32>
    %23 = vector.extract_strided_slice %4 {offsets = [0, 2], sizes = [16, 1], strides = [1, 1]} : vector<16x3xf32> to vector<16x1xf32>
    %24 = vector.broadcast %23 : vector<16x1xf32> to vector<16x192xf32>
    %25 = arith.addf %22, %24 : vector<16x192xf32>
    %cst = arith.constant 0.000000e+00 : f32
    %26 = vector.broadcast %cst : f32 to vector<1x192xf32>
    %27 = arith.cmpf oeq, %2, %26 : vector<1x192xf32>
    %cst_5 = arith.constant 1.000000e+00 : f32
    %28 = vector.broadcast %cst_5 : f32 to vector<1x192xf32>
    %29 = arith.cmpf oeq, %2, %28 : vector<1x192xf32>
    %30 = vector.shape_cast %29 : vector<1x192xi1> to vector<1x192xi1>
    %31 = vector.broadcast %30 : vector<1x192xi1> to vector<16x192xi1>
    %32 = arith.select %31, %18, %25 : vector<16x192xi1>, vector<16x192xf32>
    %33 = vector.shape_cast %27 : vector<1x192xi1> to vector<1x192xi1>
    %34 = vector.broadcast %33 : vector<1x192xi1> to vector<16x192xi1>
    %35 = arith.select %34, %11, %32 : vector<16x192xi1>, vector<16x192xf32>
    %c0_6 = arith.constant 0 : index
    %c0_7 = arith.constant 0 : index
    %36 = vector.load %arg4[%c0_6, %c0_7] : memref<16x192xf32, #tpu.memory_space<vmem>>, vector<16x192xf32>
    tpu.vector_store %arg4[%c0_6, %c0_7], %35 {strides = array<i32>} : memref<16x192xf32, #tpu.memory_space<vmem>>, vector<16x192xf32>,
    return
  }
  func.func @transform_0(%arg0: i32) -> (i32, i32) {
    %c0_i32 = arith.constant 0 : i32
    %c0_i32_0 = arith.constant 0 : i32
    %c0_i32_1 = arith.constant 0 : i32
    return %c0_i32, %c0_i32_0 : i32, i32
  }
  func.func @transform_1(%arg0: i32) -> (i32, i32) {
    %c0_i32 = arith.constant 0 : i32
    %c0_i32_0 = arith.constant 0 : i32
    return %arg0, %c0_i32 : i32, i32
  }
  func.func @transform_2(%arg0: i32) -> (i32, i32) {
    %c0_i32 = arith.constant 0 : i32
    %c0_i32_0 = arith.constant 0 : i32
    return %arg0, %c0_i32 : i32, i32
  }
  func.func @transform_3(%arg0: i32) -> (i32, i32) {
    %c0_i32 = arith.constant 0 : i32
    %c0_i32_0 = arith.constant 0 : i32
    return %arg0, %c0_i32 : i32, i32
  }
}

</mosaic_0001>

<llo_original>
// kernel: stratified_raysampler.1
$region0: #{stratified_raysampler.1}
  #allocation0 [shape = 'u32[]', space=smem, size = 0x4, offset = 0x4, fixed_abs, tag = 'smem constant byte address 0x4 - core index']
  #allocation1 [shape = 'u32[144,128]{1,0:T(1,128)}', space=vmem, size = 0x12000, scoped, tag = 'internal scratch']
  %s0 = inlined_call_operand.vmem [shape: f32[2,192], index: 0, kind: input, shape index: {}]
  %s1 = inlined_call_operand.vmem [shape: f32[16,3], index: 1, kind: input, shape index: {}]
  %s2 = inlined_call_operand.vmem [shape: f32[16,3], index: 2, kind: input, shape index: {}]
  %s3 = inlined_call_operand.vmem [shape: f32[16,192], index: 3, kind: output, shape index: {}]
  %s4 = sld [smem:[#allocation0]]
  $region22: #{stratified_raysampler.1} parent=0
    _
  %s6 = ssub.s32 1, %s4
  %s7 = scalar_select 0, %s6, %s4
  // Predicated region
  $region2: #{stratified_raysampler.1} parent=0 // pred_check
    _
  $region3: #{stratified_raysampler.1} parent=0 // pred_check_branch
    %9 = sbr.rel (0) target = $region5
  $region4: #{stratified_raysampler.1} parent=0 // pred_region
    _
  $region5: #{stratified_raysampler.1} parent=0 // pred_fallthru
    _
  // Predicated region
  $region6: #{stratified_raysampler.1} parent=0 // pred_check
    _
  $region7: #{stratified_raysampler.1} parent=0 // pred_check_branch
    %11 = sbr.rel (0) target = $region9
  $region8: #{stratified_raysampler.1} parent=0 // pred_region
    _
  $region9: #{stratified_raysampler.1} parent=0 // pred_fallthru
    _
  // Predicated region
  $region10: #{stratified_raysampler.1} parent=0 // pred_check
    _
  $region11: #{stratified_raysampler.1} parent=0 // pred_check_branch
    %13 = sbr.rel (0) target = $region13
  $region12: #{stratified_raysampler.1} parent=0 // pred_region
    _
  $region13: #{stratified_raysampler.1} parent=0 // pred_fallthru
    _
  %v14 = vld [vmem:[%s0] sm:$0xf]
  %v15 = vld [vmem:[%s1] sm:$0xff]
  %v16 = vld [vmem:[%s1 + $0x8] sm:$0xff]
  %v17 = vld [vmem:[%s2] sm:$0xff]
  %v18 = vld [vmem:[%s2 + $0x8] sm:$0xff]
  %v20 = vlaneseq
  %v21 = vshrl.u32 %v20, 7
  %v22 = vsub.s32 0, %v21
  %v23 = vrot.slane %v14, %v22
  %v24 = vlaneseq
  %v25 = vshrl.u32 %v24, 7
  %v26 = vsub.s32 2, %v25
  %v27 = vrot.slane %v14, %v26
  %v30 = vlaneseq
  %v31 = vshrl.u32 %v30, 7
  %v32 = vsub.s32 0, %v31
  %v33 = vrot.slane %v23, %v32
  %v34 = vlaneseq
  %v35 = vshrl.u32 %v34, 7
  %v36 = vsub.s32 0, %v35
  %v37 = vrot.slane %v27, %v36
  %39 = vset.pattern.permute.xlu0 0
  %40 = vperm.xlu0 %39, %v15
  %v41 = vpop.permute.xlu0 %40
  %44 = vset.pattern.permute.xlu0 0
  %45 = vperm.xlu0 %44, %v16
  %v46 = vpop.permute.xlu0 %45
  %v48 = vmul.f32 %v33, %v41
  %v49 = vmul.f32 %v37, %v41
  %v50 = vmul.f32 %v33, %v46
  %v51 = vmul.f32 %v37, %v46
  %53 = vset.pattern.permute.xlu0 0
  %54 = vperm.xlu0 %53, %v17
  %v55 = vpop.permute.xlu0 %54
  %58 = vset.pattern.permute.xlu0 0
  %59 = vperm.xlu0 %58, %v18
  %v60 = vpop.permute.xlu0 %59
  %v62 = vadd.f32 %v48, %v55
  %v63 = vadd.f32 %v49, %v55
  %v64 = vadd.f32 %v50, %v60
  %v65 = vadd.f32 %v51, %v60
  %66 = vset.pattern.permute.xlu0 1
  %67 = vperm.xlu0 %66, %v15
  %v68 = vpop.permute.xlu0 %67
  %70 = vset.pattern.permute.xlu0 1
  %71 = vperm.xlu0 %70, %v16
  %v72 = vpop.permute.xlu0 %71
  %v74 = vmul.f32 %v33, %v68
  %v75 = vmul.f32 %v37, %v68
  %v76 = vmul.f32 %v33, %v72
  %v77 = vmul.f32 %v37, %v72
  %78 = vset.pattern.permute.xlu0 1
  %79 = vperm.xlu0 %78, %v17
  %v80 = vpop.permute.xlu0 %79
  %82 = vset.pattern.permute.xlu0 1
  %83 = vperm.xlu0 %82, %v18
  %v84 = vpop.permute.xlu0 %83
  %v86 = vadd.f32 %v74, %v80
  %v87 = vadd.f32 %v75, %v80
  %v88 = vadd.f32 %v76, %v84
  %v89 = vadd.f32 %v77, %v84
  %90 = vset.pattern.permute.xlu0 2
  %91 = vperm.xlu0 %90, %v15
  %v92 = vpop.permute.xlu0 %91
  %94 = vset.pattern.permute.xlu0 2
  %95 = vperm.xlu0 %94, %v16
  %v96 = vpop.permute.xlu0 %95
  %v98 = vmul.f32 %v33, %v92
  %v99 = vmul.f32 %v37, %v92
  %v100 = vmul.f32 %v33, %v96
  %v101 = vmul.f32 %v37, %v96
  %102 = vset.pattern.permute.xlu0 2
  %103 = vperm.xlu0 %102, %v17
  %v104 = vpop.permute.xlu0 %103
  %106 = vset.pattern.permute.xlu0 2
  %107 = vperm.xlu0 %106, %v18
  %v108 = vpop.permute.xlu0 %107
  %v110 = vadd.f32 %v98, %v104
  %v111 = vadd.f32 %v99, %v104
  %v112 = vadd.f32 %v100, %v108
  %v113 = vadd.f32 %v101, %v108
  %vm114 = vcmp.eq.f32.partialorder %v14, 0.0
  %vm115 = vcmp.eq.f32.partialorder %v14, 1.0
  %v116 = vsel %vm115, 1, 0
  %v117 = vlaneseq
  %v118 = vshrl.u32 %v117, 7
  %v119 = vsub.s32 1, %v118
  %v120 = vrot.slane %v116, %v119
  %v121 = vlaneseq
  %v122 = vshrl.u32 %v121, 7
  %v123 = vsub.s32 3, %v122
  %v124 = vrot.slane %v116, %v123
  %v125 = vlaneseq
  %v126 = vshrl.u32 %v125, 7
  %v127 = vsub.s32 1, %v126
  %v128 = vrot.slane %v120, %v127
  %v129 = vlaneseq
  %v130 = vshrl.u32 %v129, 7
  %v131 = vsub.s32 1, %v130
  %v132 = vrot.slane %v124, %v131
  %vm133 = vcmp.eq.s32.totalorder %v128, 1
  %vm134 = vcmp.eq.s32.totalorder %v132, 1
  %v135 = vsel %vm133, %v86, %v110
  %v136 = vsel %vm134, %v87, %v111
  %v137 = vsel %vm133, %v88, %v112
  %v138 = vsel %vm134, %v89, %v113
  %v139 = vsel %vm114, 1, 0
  %v140 = vlaneseq
  %v141 = vshrl.u32 %v140, 7
  %v142 = vsub.s32 1, %v141
  %v143 = vrot.slane %v139, %v142
  %v144 = vlaneseq
  %v145 = vshrl.u32 %v144, 7
  %v146 = vsub.s32 3, %v145
  %v147 = vrot.slane %v139, %v146
  %v148 = vlaneseq
  %v149 = vshrl.u32 %v148, 7
  %v150 = vsub.s32 1, %v149
  %v151 = vrot.slane %v143, %v150
  %v152 = vlaneseq
  %v153 = vshrl.u32 %v152, 7
  %v154 = vsub.s32 1, %v153
  %v155 = vrot.slane %v147, %v154
  %vm156 = vcmp.eq.s32.totalorder %v151, 1
  %vm157 = vcmp.eq.s32.totalorder %v155, 1
  %v158 = vsel %vm156, %v62, %v135
  %v159 = vsel %vm157, %v63, %v136
  %v160 = vsel %vm156, %v64, %v137
  %v161 = vsel %vm157, %v65, %v138
  %162 = vst [vmem:[%s3] sm:$0xff] %v158
  %vm163 = vcmask 523264
  %164 = vst.msk [vmem:[%s3 + $0x8] sm:$0xff] %vm163, %v159
  %165 = vst [vmem:[%s3 + $0x10] sm:$0xff] %v160
  %166 = vst.msk [vmem:[%s3 + $0x18] sm:$0xff] %vm163, %v161
  // Predicated region
  $region14: #{stratified_raysampler.1} parent=0 // pred_check
    _
  $region15: #{stratified_raysampler.1} parent=0 // pred_check_branch
    %168 = sbr.rel (0) target = $region17
  $region16: #{stratified_raysampler.1} parent=0 // pred_region
    _
  $region17: #{stratified_raysampler.1} parent=0 // pred_fallthru
    _
  // Predicated region
  $region18: #{stratified_raysampler.1} parent=0 // pred_check
    _
  $region19: #{stratified_raysampler.1} parent=0 // pred_check_branch
    %170 = sbr.rel (0) target = $region21
  $region20: #{stratified_raysampler.1} parent=0 // pred_region
    _
  $region21: #{stratified_raysampler.1} parent=0 // pred_fallthru
    _

</llo_original>
